<compile_context>
chip_gen: v7x
topology: tpu7x:2x2x1
jax: 0.10.0
libtpu: 0.0.40
codegen_flags: <defaults>
</compile_context>

<pallas_src>
import functools
import math

import jax
import jax.numpy as jnp
from jax import lax
from jax.experimental import pallas as pl
from jax.experimental.pallas import tpu as pltpu

_MIB = 1024 * 1024


# ----------------------------------------------------------------------------
# Hardware-aware sizing helpers
# ----------------------------------------------------------------------------
def _hw_params():
    """Returns (block_io_bytes, vmem_limit_bytes) tuned per TPU generation."""
    vmem_cap = 64 * _MIB                     # conservative default (v7x per-TC)
    try:
        vmem_cap = int(pltpu.get_tpu_info().vmem_capacity_bytes)
    except Exception:                        # info query unavailable -> defaults
        pass
    # Never ask for more scoped VMEM than ~3/4 of physical.
    vmem_limit = min(64 * _MIB, (vmem_cap * 3) // 4)
    # v5e/v6e (128 MiB VMEM): 8 MiB of HBM traffic per step keeps the ~0.35 us
    # per-step overhead at a few percent.  v7x (64 MiB VMEM): slightly smaller
    # blocks so double-buffered in/out + fp32 temporaries stay well under the
    # scoped limit.
    block_io = 8 * _MIB if vmem_cap >= 100 * _MIB else 6 * _MIB
    return block_io, vmem_limit


def _sublane_align(itemsize):
    # fp32 -> 8 rows/vreg, bf16/fp16 -> 16, int8/fp8 -> 32.
    return {1: 32, 2: 16, 4: 8}.get(itemsize, 8)


def _round_up(x, m):
    return ((x + m - 1) // m) * m


def _row_tile(rows, d, itemsize, block_io_bytes):
    """Row tile sized by actual HBM bytes per step (input + output)."""
    align = _sublane_align(itemsize)
    bytes_per_row = 2 * d * itemsize                      # in + out traffic
    tm = max((block_io_bytes // bytes_per_row) // align * align, align)
    tm = min(tm, _round_up(rows, align))
    if rows > align:
        # Guarantee >= 2 grid steps so v7x megacore sharding and DMA/compute
        # pipelining are engaged (no cost on single-TC v5e/v6e).
        tm = min(tm, max(_round_up(pl.cdiv(rows, 2), align), align))
    return tm


# ----------------------------------------------------------------------------
# Kernels
# ----------------------------------------------------------------------------
def _ssm_last_kernel(x_ref, o_ref, *, eps):
    # (TM, D) tile; reduction over the lane axis, D untiled (exact row sum).
    # x*x is recomputed for the store rather than held live across the
    # reduction (keeps VMEM temporaries small on v7x).
    x = x_ref[...].astype(jnp.float32)
    denom = jnp.maximum(jnp.sum(x * x, axis=-1, keepdims=True), eps)
    inv = 1.0 / denom                       # exact; per-row so effectively free
    o_ref[...] = ((x * x) * inv).astype(o_ref.dtype)


def _ssm_mid_kernel(x_ref, o_ref, *, eps):
    # (TR, D, C) tile; reduction over the sublane (second-minor) axis so that
    # dim != -1 needs no wrapper transpose (original minor axis stays on lanes).
    x = x_ref[...].astype(jnp.float32)
    denom = jnp.maximum(jnp.sum(x * x, axis=1, keepdims=True), eps)
    o_ref[...] = ((x * x) * (1.0 / denom)).astype(o_ref.dtype)


def _denom_kernel(x_ref, den_ref, acc_ref, *, eps, d_total, td):
    # Pass 1 of the D-tiled schedule: accumulate sum(x^2) per row.
    k = pl.program_id(1)

    @pl.when(k == 0)
    def _():
        acc_ref[...] = jnp.zeros_like(acc_ref)

    x = x_ref[...].astype(jnp.float32)
    # Mask out-of-bounds columns of the (possibly partial) last D-tile so the
    # reduction never touches padded garbage.
    col = lax.broadcasted_iota(jnp.int32, x.shape, 1) + k * td
    x = jnp.where(col < d_total, x, 0.0)
    acc_ref[...] += jnp.sum(x * x, axis=-1, keepdims=True)

    @pl.when(k == pl.num_programs(1) - 1)
    def _():
        den_ref[...] = jnp.maximum(acc_ref[...], eps)


def _scale_kernel(x_ref, den_ref, o_ref):
    # Pass 2 of the D-tiled schedule: scale x^2 by the precomputed 1/denom.
    x = x_ref[...].astype(jnp.float32)
    o_ref[...] = ((x * x) * (1.0 / den_ref[...])).astype(o_ref.dtype)


# ----------------------------------------------------------------------------
# pallas_call wrappers
# ----------------------------------------------------------------------------
def _single_pass(x2d, eps, block_io_bytes, vmem_limit):
    rows, d = x2d.shape
    itemsize = jnp.dtype(x2d.dtype).itemsize
    tm = _row_tile(rows, d, itemsize, block_io_bytes)
    grid = (pl.cdiv(rows, tm),)
    cost = pl.CostEstimate(flops=3 * rows * d, transcendentals=rows,
                           bytes_accessed=2 * rows * d * itemsize)
    return pl.pallas_call(
        functools.partial(_ssm_last_kernel, eps=eps),
        out_shape=jax.ShapeDtypeStruct((rows, d), x2d.dtype),
        grid_spec=pltpu.PrefetchScalarGridSpec(
            num_scalar_prefetch=0,
            grid=grid,
            in_specs=[pl.BlockSpec((tm, d), lambda i: (i, 0))],
            out_specs=pl.BlockSpec((tm, d), lambda i: (i, 0)),
        ),
        compiler_params=pltpu.CompilerParams(
            dimension_semantics=("parallel",),
            vmem_limit_bytes=vmem_limit,
        ),
        cost_estimate=cost,
    )(x2d)


def _two_pass(x2d, eps, block_io_bytes, vmem_limit):
    """D-tiled fallback for very large D (denominator pass + scaling pass)."""
    rows, d = x2d.shape
    itemsize = jnp.dtype(x2d.dtype).itemsize
    align = _sublane_align(itemsize)
    tm = align
    td = max((block_io_bytes // (2 * tm * itemsize)) // 128 * 128, 128)
    td = min(td, _round_up(d, 128))
    grid = (pl.cdiv(rows, tm), pl.cdiv(d, td))
    sem = ("parallel", "arbitrary")

    denom = pl.pallas_call(
        functools.partial(_denom_kernel, eps=eps, d_total=d, td=td),
        out_shape=jax.ShapeDtypeStruct((rows, 1), jnp.float32),
        grid_spec=pltpu.PrefetchScalarGridSpec(
            num_scalar_prefetch=0,
            grid=grid,
            in_specs=[pl.BlockSpec((tm, td), lambda i, k: (i, k))],
            out_specs=pl.BlockSpec((tm, 1), lambda i, k: (i, 0)),
            scratch_shapes=[pltpu.VMEM((tm, 1), jnp.float32)],
        ),
        compiler_params=pltpu.CompilerParams(
            dimension_semantics=sem, vmem_limit_bytes=vmem_limit),
        cost_estimate=pl.CostEstimate(flops=2 * rows * d, transcendentals=0,
                                      bytes_accessed=rows * d * itemsize),
    )(x2d)

    return pl.pallas_call(
        _scale_kernel,
        out_shape=jax.ShapeDtypeStruct((rows, d), x2d.dtype),
        grid_spec=pltpu.PrefetchScalarGridSpec(
            num_scalar_prefetch=0,
            grid=grid,
            in_specs=[pl.BlockSpec((tm, td), lambda i, k: (i, k)),
                      pl.BlockSpec((tm, 1), lambda i, k: (i, 0))],
            out_specs=pl.BlockSpec((tm, td), lambda i, k: (i, k)),
        ),
        compiler_params=pltpu.CompilerParams(
            dimension_semantics=sem, vmem_limit_bytes=vmem_limit),
        cost_estimate=pl.CostEstimate(flops=2 * rows * d, transcendentals=rows,
                                      bytes_accessed=2 * rows * d * itemsize),
    )(x2d, denom)


def _squared_softmax_2d(x2d, eps, block_io_bytes, vmem_limit):
    rows, d = x2d.shape
    itemsize = jnp.dtype(x2d.dtype).itemsize
    align = _sublane_align(itemsize)
    # Footprint of a minimal single-pass strip: double-buffered in/out in the
    # input dtype plus fp32 temporaries.  If it would press the VMEM budget,
    # use the D-tiled two-pass schedule instead.
    min_strip_bytes = align * d * (4 * itemsize + 8)
    if min_strip_bytes <= (vmem_limit * 3) // 5:
        return _single_pass(x2d, eps, block_io_bytes, vmem_limit)
    return _two_pass(x2d, eps, block_io_bytes, vmem_limit)


def _squared_softmax_mid(x3d, eps, block_io_bytes, vmem_limit):
    r, d, c = x3d.shape
    itemsize = jnp.dtype(x3d.dtype).itemsize
    bytes_per_slice = 2 * d * c * itemsize
    tr = max(block_io_bytes // bytes_per_slice, 1)
    tr = min(tr, r)
    if r > 1:
        tr = min(tr, pl.cdiv(r, 2))          # >= 2 grid steps for megacore
    grid = (pl.cdiv(r, tr),)
    cost = pl.CostEstimate(flops=3 * r * d * c, transcendentals=r * c,
                           bytes_accessed=2 * r * d * c * itemsize)
    return pl.pallas_call(
        functools.partial(_ssm_mid_kernel, eps=eps),
        out_shape=jax.ShapeDtypeStruct((r, d, c), x3d.dtype),
        grid_spec=pltpu.PrefetchScalarGridSpec(
            num_scalar_prefetch=0,
            grid=grid,
            in_specs=[pl.BlockSpec((tr, d, c), lambda i: (i, 0, 0))],
            out_specs=pl.BlockSpec((tr, d, c), lambda i: (i, 0, 0)),
        ),
        compiler_params=pltpu.CompilerParams(
            dimension_semantics=("parallel",),
            vmem_limit_bytes=vmem_limit,
        ),
        cost_estimate=cost,
    )(x3d)


def squared_softmax(x, dim=-1, eps=1e-6, block_io_bytes=None,
                    vmem_limit_bytes=None):
    """Pallas implementation of SquaredSoftmax (L1-normalize x^2 along `dim`)."""
    ndim = x.ndim
    dim = dim % ndim
    default_block, default_vmem = _hw_params()
    block_io_bytes = default_block if block_io_bytes is None else block_io_bytes
    vmem_limit = default_vmem if vmem_limit_bytes is None else vmem_limit_bytes
    itemsize = jnp.dtype(x.dtype).itemsize
    orig_shape = x.shape

    if dim == ndim - 1:
        d = orig_shape[-1]
        rows = int(math.prod(orig_shape[:-1]))
        out2d = _squared_softmax_2d(x.reshape(rows, d), eps,
                                    block_io_bytes, vmem_limit)
        return out2d.reshape(orig_shape)

    # Normalization axis is not minor: reshape (free, contiguous) to (R, D, C)
    # and reduce over the sublane axis -- avoids the moveaxis round-trip that
    # would triple HBM traffic for this bandwidth-bound op.
    r = int(math.prod(orig_shape[:dim]))
    d = orig_shape[dim]
    c = int(math.prod(orig_shape[dim + 1:]))
    slice_footprint = d * c * (4 * itemsize + 8)
    if slice_footprint <= (vmem_limit * 3) // 5:
        out3d = _squared_softmax_mid(x.reshape(r, d, c), eps,
                                     block_io_bytes, vmem_limit)
        return out3d.reshape(orig_shape)

    # TODO(synk): huge D*C slabs on a non-minor dim still transpose; fuse the
    # transpose into BlockSpec index_maps if this ever becomes a hot path.
    xt = jnp.moveaxis(x, dim, -1)
    rows = int(math.prod(xt.shape[:-1]))
    out2d = _squared_softmax_2d(xt.reshape(rows, xt.shape[-1]), eps,
                                block_io_bytes, vmem_limit)
    return jnp.moveaxis(out2d.reshape(xt.shape), -1, dim)


def _reference(x, dim=-1, eps=1e-6):
    xf = x.astype(jnp.float32)
    sq = xf * xf
    denom = jnp.maximum(jnp.sum(jnp.abs(sq), axis=dim, keepdims=True), eps)
    return (sq / denom).astype(x.dtype)


if __name__ == "__main__":
    key = jax.random.PRNGKey(0)
    batch, seq, hidden = 2, 8, 32
    x = jax.random.normal(key, (batch, seq, hidden), dtype=jnp.float32)

    # fp32, dim=-1 (single-pass lane-reduction path).
    out = jax.block_until_ready(squared_softmax(x))
    ref = _reference(x)
    assert out.shape == x.shape and out.dtype == x.dtype
    assert jnp.allclose(out, ref, atol=1e-5, rtol=1e-5)

    # bf16 input (math stays fp32 inside the kernel).
    xb = x.astype(jnp.bfloat16)
    outb = jax.block_until_ready(squared_softmax(xb))
    refb = _reference(xb)
    assert outb.dtype == jnp.bfloat16
    assert jnp.allclose(outb.astype(jnp.float32), refb.astype(jnp.float32),
                        atol=1e-2, rtol=1e-2)

    # Non-divisible row count + forced small tile: masked tail row-block and a
    # guaranteed multi-step grid (rows=15, tm=8 -> grid=(2,)).
    x_tail = jax.random.normal(jax.random.PRNGKey(1), (3, 5, 256),
                               dtype=jnp.float32)
    out_tail = jax.block_until_ready(
        squared_softmax(x_tail, block_io_bytes=16 * 1024))
    assert jnp.allclose(out_tail, _reference(x_tail), atol=1e-5, rtol=1e-5)

    # Non-minor normalization axis: sublane-reduction kernel, no transpose.
    out_dim1 = jax.block_until_ready(squared_softmax(x, dim=1))
    assert jnp.allclose(out_dim1, _reference(x, dim=1), atol=1e-5, rtol=1e-5)

    # D-tiled two-pass fallback, exercised directly with a tiny block budget;
    # D=320 is not a multiple of 128, so the partial last D-tile is masked in
    # the reduction pass.
    x_big = jax.random.normal(jax.random.PRNGKey(2), (16, 320),
                              dtype=jnp.float32)
    out_big = jax.block_until_ready(
        _two_pass(x_big, 1e-6, block_io_bytes=8 * 1024, vmem_limit=32 * _MIB))
    assert jnp.allclose(out_big, _reference(x_big), atol=1e-5, rtol=1e-5)

    print("KERNEL_OK")
</pallas_src>

<mosaic_0001>
module attributes {stable_mosaic.version = 11 : i64} {
  func.func @_ssm_last_kernel(%arg0: i32, %arg1: memref<8x32xf32, #tpu.memory_space<vmem>>, %arg2: memref<8x32xf32, #tpu.memory_space<vmem>>) attributes {dimension_semantics = [#tpu.dimension_semantics<parallel>], iteration_bounds = array<i64: 2>, scalar_prefetch = 0 : i64, scratch_operands = 0 : i64, tpu.core_type = #tpu.core_type<tc>, window_params = [{transform_indices = @transform_0, window_bounds = array<i64: 8, 32>}, {transform_indices = @transform_1, window_bounds = array<i64: 8, 32>}]} {
    %c0 = arith.constant 0 : index
    %c0_0 = arith.constant 0 : index
    %0 = vector.load %arg1[%c0, %c0_0] : memref<8x32xf32, #tpu.memory_space<vmem>>, vector<8x32xf32>
    %1 = arith.mulf %0, %0 : vector<8x32xf32>
    %cst = arith.constant dense<0.000000e+00> : vector<8xf32>
    %2 = vector.multi_reduction <add>, %1, %cst [1] : vector<8x32xf32> to vector<8xf32>
    %3 = vector.shape_cast %2 : vector<8xf32> to vector<8x1xf32>
    %cst_1 = arith.constant 9.99999997E-7 : f32
    %4 = vector.broadcast %cst_1 : f32 to vector<8x1xf32>
    %5 = arith.maximumf %3, %4 : vector<8x1xf32>
    %cst_2 = arith.constant 1.000000e+00 : f32
    %6 = vector.broadcast %cst_2 : f32 to vector<8x1xf32>
    %7 = arith.divf %6, %5 : vector<8x1xf32>
    %8 = arith.mulf %0, %0 : vector<8x32xf32>
    %9 = vector.broadcast %7 : vector<8x1xf32> to vector<8x32xf32>
    %10 = arith.mulf %8, %9 : vector<8x32xf32>
    %c0_3 = arith.constant 0 : index
    %c0_4 = arith.constant 0 : index
    %11 = vector.load %arg2[%c0_3, %c0_4] : memref<8x32xf32, #tpu.memory_space<vmem>>, vector<8x32xf32>
    tpu.vector_store %arg2[%c0_3, %c0_4], %10 {strides = array<i32>} : memref<8x32xf32, #tpu.memory_space<vmem>>, vector<8x32xf32>,
    return
  }
  func.func @transform_0(%arg0: i32) -> (i32, i32) {
    %c0_i32 = arith.constant 0 : i32
    %c0_i32_0 = arith.constant 0 : i32
    return %arg0, %c0_i32 : i32, i32
  }
  func.func @transform_1(%arg0: i32) -> (i32, i32) {
    %c0_i32 = arith.constant 0 : i32
    %c0_i32_0 = arith.constant 0 : i32
    return %arg0, %c0_i32 : i32, i32
  }
}

</mosaic_0001>

<llo_original>
// kernel: tpu_custom_call.1
$region0: #{tpu_custom_call.1}
  #allocation0 [shape = 'u32[]', space=smem, size = 0x4, offset = 0x4, fixed_abs, tag = 'smem constant byte address 0x4 - core index']
  #allocation1 [shape = 'u32[144,128]{1,0:T(1,128)}', space=vmem, size = 0x12000, scoped, tag = 'internal scratch']
  %s0 = inlined_call_operand.hbm [shape: f32[16,32], index: 0, kind: input, shape index: {}]
  %s1 = inlined_call_operand.hbm [shape: f32[16,32], index: 1, kind: output, shape index: {}]
  %s2 = sld [smem:[#allocation0]]
  $region41: #{tpu_custom_call.1} parent=0
    _
  %s4 = ssub.s32 1, %s2
  %s5 = scalar_select 0, %s4, %s2
  $region1: #{tpu_custom_call.1} parent=0
    #allocation2 [shape = 'u8[8192]{0}', space=vmem, size = 0x2000, scoped, tag = 'input window, operand 0']
    #allocation3 [shape = 's32[2]{0}', space=sflag, size = 0x8, scoped, tag = 'scoped memory for tpu_custom_call.1']
    #allocation4 [shape = 's32[2]{0}', space=sflag, size = 0x8, scoped, tag = 'scoped memory for tpu_custom_call.1']
    #allocation5 [shape = 'u8[8192]{0}', space=vmem, size = 0x2000, scoped, tag = 'output window, operand 0']
    %6 = vsyncpa [#allocation3], 0
    %s7 = scalar_lea.sflag [#allocation3], 1
    %8 = vsyncpa %s7, 0
    %9 = vsyncpa [#allocation4], 0
    %s10 = scalar_lea.sflag [#allocation4], 1
    %11 = vsyncpa %s10, 0
    loop: start=0, step=1, limit=4
    $region2: #{tpu_custom_call.1} parent=1 // loop_pre_header
      _
    $region3: #{tpu_custom_call.1} parent=1 // loop_header
      %s13 = sphi 0, %s17
      %p14 = scmp.ge.s32.totalorder %s13, 4
      %s23 = sphi 0, %s25
      %s26 = sphi 0, %s23
      %s27 = sphi 0, %s26
      %s43 = sphi 0, %s27
      %s49 = sphi 0, %s51
      %s52 = sphi 0, %s49
      %s53 = sphi 0, %s52
      %s69 = sphi 0, %s53
    $region4: #{tpu_custom_call.1} parent=1 // loop_header_branch
      %16 = sbr.rel (%p14) target = $region8
    $region5: #{tpu_custom_call.1} parent=1 // loop_body
      %s18 = ssub.s32 %s13, 1
      %s19 = ssub.s32 %s13, 2
      %s20 = sadd.s32 %s13, 1
      %s21 = ssub.s32 %s13, %s20
      %p22 = scmp.eq.s32.totalorder %s21, 0
      %s24 = sadd.s32 %s23, 1
      %s25 = scalar_select %p22, %s23, %s24
      %p28 = pneg %p22
      %p29 = scmp.eq.s32.totalorder %s13, 1
      %p30 = por %p28, %p29
      %p31 = scmp.ne.s32.totalorder %s23, %s26
      %p32 = scmp.eq.s32.totalorder %s13, 0
      %p33 = por %p31, %p32
      %p34 = scmp.ne.s32.totalorder %s23, %s26
      %p35 = scmp.eq.s32.totalorder %s18, 1
      %p36 = por %p34, %p35
      %p37 = scmp.ne.s32.totalorder %s26, %s27
      %p38 = scmp.eq.s32.totalorder %s18, 0
      %p39 = por %p37, %p38
      %p40 = scmp.ne.s32.totalorder %s26, %s27
      %p41 = scmp.eq.s32.totalorder %s19, 1
      %p42 = por %p40, %p41
      %p44 = scmp.ne.s32.totalorder %s27, %s43
      %p45 = scmp.eq.s32.totalorder %s19, 0
      %p46 = por %p44, %p45
      %s47 = ssub.s32 %s13, %s20
      %p48 = scmp.eq.s32.totalorder %s47, 0
      %s50 = sadd.s32 %s49, 1
      %s51 = scalar_select %p48, %s49, %s50
      %p54 = pneg %p48
      %p55 = scmp.eq.s32.totalorder %s13, 1
      %p56 = por %p54, %p55
      %p57 = scmp.ne.s32.totalorder %s49, %s52
      %p58 = scmp.eq.s32.totalorder %s13, 0
      %p59 = por %p57, %p58
      %p60 = scmp.ne.s32.totalorder %s49, %s52
      %p61 = scmp.eq.s32.totalorder %s18, 1
      %p62 = por %p60, %p61
      %p63 = scmp.ne.s32.totalorder %s52, %s53
      %p64 = scmp.eq.s32.totalorder %s18, 0
      %p65 = por %p63, %p64
      %p66 = scmp.ne.s32.totalorder %s52, %s53
      %p67 = scmp.eq.s32.totalorder %s19, 1
      %p68 = por %p66, %p67
      %p70 = scmp.ne.s32.totalorder %s53, %s69
      %p71 = scmp.eq.s32.totalorder %s19, 0
      %p72 = por %p70, %p71
      %p73 = scmp.le.s32.totalorder 1, %s13
      %p74 = scmp.lt.s32.totalorder %s13, 3
      %p75 = pnand %p73, %p74
      %p76 = pneg %p75
      // Predicated region
      $region9: #{tpu_custom_call.1} parent=5 // pred_check
        _
      $region10: #{tpu_custom_call.1} parent=5 // pred_check_branch
        %78 = sbr.rel (%p75) target = $region12
      $region11: #{tpu_custom_call.1} parent=5 // pred_region
        %s79 = ssub.s32 %s13, 1
      $region12: #{tpu_custom_call.1} parent=5 // pred_fallthru
        _
      %p80 = scmp.lt.s32.totalorder %s13, 2
      // Predicated region
      $region13: #{tpu_custom_call.1} parent=5 // pred_check
        %p81 = pneg %p80
      $region14: #{tpu_custom_call.1} parent=5 // pred_check_branch
        %83 = sbr.rel (%p81) target = $region16
      $region15: #{tpu_custom_call.1} parent=5 // pred_region
        // Predicated region
        $region17: #{tpu_custom_call.1} parent=15 // pred_check
          %p84 = pneg %p33
        $region18: #{tpu_custom_call.1} parent=15 // pred_check_branch
          %86 = sbr.rel (%p84) target = $region20
        $region19: #{tpu_custom_call.1} parent=15 // pred_region
          %s87 = sand.u32 %s23, 1
          %s88 = scalar_lea.sflag [#allocation3], %s87
          %s89 = sand.u32 %s23, 1
          %s90 = smul.addr %s89, 8
          %s91 = scalar_lea.vmem [#allocation2], %s90
          %s93 = ssub.s32 128, 128
          %94 = vsyncadd %s88, %s93
          %s95 = smul.addr %s13, 128
          %s96 = scalar_lea.hbm %s0, %s95
          %s98 = sshll.u32 %s91, 4
          %s99 = int_to_ptr.vmem [resolvable:$true] %s98
          %101 = dma.hbm_to_vmem [thread:$0]  %s96, 128, %s99, %s88
        $region20: #{tpu_custom_call.1} parent=15 // pred_fallthru
          _
      $region16: #{tpu_custom_call.1} parent=5 // pred_fallthru
        _
      %p102 = scmp.le.s32.totalorder 1, %s13
      %p103 = scmp.lt.s32.totalorder %s13, 3
      %p104 = pnand %p102, %p103
      %p105 = pneg %p104
      // Predicated region
      $region21: #{tpu_custom_call.1} parent=5 // pred_check
        _
      $region22: #{tpu_custom_call.1} parent=5 // pred_check_branch
        %107 = sbr.rel (%p104) target = $region24
      $region23: #{tpu_custom_call.1} parent=5 // pred_region
        %s108 = ssub.s32 %s13, 1
        %s109 = sand.u32 %s26, 1
        %s110 = scalar_lea.sflag [#allocation3], %s109
        %s111 = sand.u32 %s26, 1
        %s112 = smul.addr %s111, 8
        %s113 = scalar_lea.vmem [#allocation2], %s112
        // Predicated region
        $region25: #{tpu_custom_call.1} parent=23 // pred_check
          %p114 = pneg %p39
        $region26: #{tpu_custom_call.1} parent=23 // pred_check_branch
          %116 = sbr.rel (%p114) target = $region28
        $region27: #{tpu_custom_call.1} parent=23 // pred_region
          %117 = dma.done %s110, 128
        $region28: #{tpu_custom_call.1} parent=23 // pred_fallthru
          _
        %s118 = sand.u32 %s26, 1
        %s119 = scalar_lea.sflag [#allocation3], %s118
        %s120 = sand.u32 %s26, 1
        %s121 = smul.addr %s120, 8
        %s122 = scalar_lea.vmem [#allocation2], %s121
        %p123 = pneg %p39
        %p124 = pneg %p36
        %p125 = pneg %p65
        %p126 = pneg %p62
        %s127 = sand.u32 %s52, 1
        %s128 = scalar_lea.sflag [#allocation4], %s127
        %s129 = sand.u32 %s52, 1
        %s130 = smul.addr %s129, 8
        %s131 = scalar_lea.vmem [#allocation5], %s130
        %v132 = vld [vmem:[%s113] sm:$0xff]
        %v133 = vmul.f32 %v132, %v132
        %vm134 = vcmask 261120
        %v135 = vsel %vm134, %v133, 0.0
        %136 = vadd.xlane.f32.xlu0 %v135
        %v137 = vpop.xlane.xlu0 %136
        %v138 = vmax.f32 %v137, 1e-06
        %v139 = vrcp.pop %v138
        %v140 = vmul.f32 1.0, %v139
        %v141 = vmul.f32 %v133, %v140
        %142 = vst.msk [vmem:[%s131] sm:$0xff] %vm134, %v141
        %s143 = sand.u32 %s52, 1
        %s144 = scalar_lea.sflag [#allocation4], %s143
        %s145 = sand.u32 %s52, 1
        %s146 = smul.addr %s145, 8
        %s147 = scalar_lea.vmem [#allocation5], %s146
        // Predicated region
        $region29: #{tpu_custom_call.1} parent=23 // pred_check
          %p148 = pneg %p62
        $region30: #{tpu_custom_call.1} parent=23 // pred_check_branch
          %150 = sbr.rel (%p148) target = $region32
        $region31: #{tpu_custom_call.1} parent=23 // pred_region
          %s152 = ssub.s32 128, 128
          %153 = vsyncadd %s144, %s152
          %s154 = smul.addr %s18, 128
          %s155 = scalar_lea.hbm %s1, %s154
          %s157 = sshll.u32 %s147, 4
          %s158 = int_to_ptr.vmem [resolvable:$true] %s157
          %160 = dma.vmem_to_hbm [thread:$0]  %s158, 128, %s155, %s144
        $region32: #{tpu_custom_call.1} parent=23 // pred_fallthru
          _
      $region24: #{tpu_custom_call.1} parent=5 // pred_fallthru
        _
      %p161 = scmp.le.s32.totalorder 2, %s13
      // Predicated region
      $region33: #{tpu_custom_call.1} parent=5 // pred_check
        %p162 = pneg %p161
      $region34: #{tpu_custom_call.1} parent=5 // pred_check_branch
        %164 = sbr.rel (%p162) target = $region36
      $region35: #{tpu_custom_call.1} parent=5 // pred_region
        %s165 = ssub.s32 %s13, 2
        // Predicated region
        $region37: #{tpu_custom_call.1} parent=35 // pred_check
          %p166 = pneg %p68
        $region38: #{tpu_custom_call.1} parent=35 // pred_check_branch
          %168 = sbr.rel (%p166) target = $region40
        $region39: #{tpu_custom_call.1} parent=35 // pred_region
          %s169 = sand.u32 %s53, 1
          %s170 = scalar_lea.sflag [#allocation4], %s169
          %s171 = sand.u32 %s53, 1
          %s172 = smul.addr %s171, 8
          %s173 = scalar_lea.vmem [#allocation5], %s172
          %174 = dma.done %s170, 128
        $region40: #{tpu_custom_call.1} parent=35 // pred_fallthru
          _
      $region36: #{tpu_custom_call.1} parent=5 // pred_fallthru
        _
    $region6: #{tpu_custom_call.1} parent=1 // loop_footer
      %s17 = sadd.s32 1, %s13
    $region7: #{tpu_custom_call.1} parent=1 // loop_footer_branch
      %12 = sbr.rel target = $region3
    $region8: #{tpu_custom_call.1} parent=1 // loop_exit
      _
    %175 = vsyncpa [#allocation3], 1
    %s176 = scalar_lea.sflag [#allocation3], 1
    %177 = vsyncpa %s176, 1
    %178 = vsyncpa [#allocation4], 1
    %s179 = scalar_lea.sflag [#allocation4], 1
    %180 = vsyncpa %s179, 1

</llo_original>
